<compile_context>
chip_gen: v7x
topology: tpu7x:2x2x1
jax: 0.10.0
libtpu: 0.0.40
codegen_flags: <defaults>
</compile_context>

<pallas_src>
import functools
import math

import jax
import jax.numpy as jnp
from jax.experimental import pallas as pl
from jax.experimental.pallas import tpu as pltpu


def lighting_kernel(u_ref, x_ref, out_ref, sums_ref, *, k, hw):
    """One grid step = k consecutive channels (< ncInput) of every batch row.

    u_ref    : (1, N, k)   upFeat values for this channel block (f32)
    x_ref    : (N, k*hw)   innerFeat channels [c0, c0+k), lane-dense (aliased in)
    out_ref  : (N, k*hw)   same HBM block as x_ref (aliased output)
    sums_ref : (N, 128)    per-channel spatial sums of this block, lanes [0, k)
    """
    n = x_ref.shape[0]
    x = x_ref[...].astype(jnp.float32)          # (N, k*hw) original values
    u = u_ref[0].astype(jnp.float32)            # (N, k)

    sum_parts = []
    out_parts = []
    for i in range(k):                          # static, lane-aligned slices
        xi = x[:, i * hw:(i + 1) * hw]                              # (N, hw)
        sum_parts.append(jnp.sum(xi, axis=-1, keepdims=True))      # (N, 1)
        out_parts.append(jnp.broadcast_to(u[:, i:i + 1], (n, hw)))  # (N, hw)

    if k < 128:                                 # fully write the sums block
        sum_parts.append(jnp.zeros((n, 128 - k), jnp.float32))
    sums_ref[...] = jnp.concatenate(sum_parts, axis=-1)

    # Overwrite innerFeat[:, c0:c0+k, :, :] with the broadcast upFeat values.
    out_ref[...] = jnp.concatenate(out_parts, axis=-1).astype(out_ref.dtype)


def _prelu(v, a):
    return jnp.maximum(v, 0.0) + a * jnp.minimum(v, 0.0)


def _choose_channels_per_block(nc_input, hw, n_batch, itemsize, max_block_bytes):
    """Largest k such that k | nc_input, (k*hw) % 128 == 0 and k <= 128,
    preferring blocks <= max_block_bytes.  None if no such k exists."""
    base = 128 // math.gcd(hw, 128)             # smallest lane-aligned k
    cands = [k for k in range(base, nc_input + 1, base)
             if nc_input % k == 0 and k <= 128]
    if not cands:
        return None
    fitting = [k for k in cands
               if n_batch * k * hw * itemsize <= max_block_bytes]
    return max(fitting) if fitting else min(cands)


@functools.partial(
    jax.jit,
    static_argnames=("nc_input", "nc_output", "nc_middle",
                     "channels_per_block", "max_block_bytes"),
    donate_argnames=("inner_feat",))
def _forward(inner_feat, target_light, params, *, nc_input, nc_output,
             nc_middle, channels_per_block=None, max_block_bytes=4 << 20):
    N, C, H, W = inner_feat.shape
    HW = H * W
    f32 = jnp.float32
    itemsize = jnp.dtype(inner_feat.dtype).itemsize

    # 1x1-conv weights (out, in, 1, 1) -> (out, in) matrices.
    w1 = params["predict_FC1"].reshape(nc_middle, nc_input).astype(f32)
    w2 = params["predict_FC2"].reshape(nc_output, nc_middle).astype(f32)
    p1 = params["post_FC1"].reshape(nc_middle, nc_output).astype(f32)
    p2 = params["post_FC2"].reshape(nc_input, nc_middle).astype(f32)
    a_pred = params["predict_prelu"].reshape(()).astype(f32)   # PReLU(num_parameters=1)
    a_post = params["post_prelu"].reshape(()).astype(f32)

    # ---- post branch: target_light -> upFeat (tiny; stays in XLA) ----------
    tl = target_light.reshape(N, nc_output).astype(f32)
    u = jnp.maximum(_prelu(tl @ p1.T, a_post) @ p2.T, 0.0)       # (N, nc_input)

    # ---- pick the channel packing ------------------------------------------
    k = channels_per_block
    if k is None:
        k = _choose_channels_per_block(nc_input, HW, N, itemsize, max_block_bytes)
    if k is not None and (nc_input % k or (k * HW) % 128 or k > 128):
        k = None

    if k is None:
        # TODO(synk): shapes where no k satisfies (k*H*W % 128 == 0 and
        # k | ncInput) fall back to plain XLA; a ragged-last-block kernel
        # would cover them without this fallback.
        feat = inner_feat[:, :nc_input].astype(f32).mean(axis=(2, 3))
        light = _prelu(feat @ w1.T, a_pred) @ w2.T
        up4 = jnp.broadcast_to(u[:, :, None, None].astype(inner_feat.dtype),
                               (N, nc_input, H, W))
        inner_out = inner_feat.at[:, :nc_input].set(up4)
        return (inner_out, inner_out[:, nc_input:],
                light.reshape(N, nc_output, 1, 1))

    num_blocks = nc_input // k

    # Lane-dense view: channel c of batch n lives at columns [c*HW, (c+1)*HW).
    inner2d = inner_feat.reshape(N, C * HW)                      # free reshape
    # Tiny per-block upFeat values: block cb holds u[:, cb*k : cb*k+k].
    u_blocks = u.reshape(N, num_blocks, k).transpose(1, 0, 2)    # (nb, N, k)

    tile_bytes = N * k * HW * itemsize
    # Aliased in+out blocks are each double-buffered => ~4x tile footprint;
    # give comfortable headroom, stay well under v7x's 64 MiB physical VMEM.
    vmem_limit = int(min(96 << 20, max(32 << 20, 8 * tile_bytes + (2 << 20))))

    kernel = functools.partial(lighting_kernel, k=k, hw=HW)
    inner2d_out, sums = pl.pallas_call(
        kernel,
        grid=(num_blocks,),                          # one step per k channels
        in_specs=[
            pl.BlockSpec((1, N, k), lambda cb: (cb, 0, 0)),      # upFeat block
            pl.BlockSpec((N, k * HW), lambda cb: (0, cb)),       # innerFeat chans
        ],
        out_specs=(
            pl.BlockSpec((N, k * HW), lambda cb: (0, cb)),       # aliased output
            pl.BlockSpec((N, 128), lambda cb: (0, cb)),          # packed sums
        ),
        out_shape=(
            jax.ShapeDtypeStruct((N, C * HW), inner_feat.dtype),
            jax.ShapeDtypeStruct((N, num_blocks * 128), f32),
        ),
        # innerFeat updated in place; channels >= nc_input never DMA'd.
        input_output_aliases={1: 0},
        compiler_params=pltpu.CompilerParams(
            dimension_semantics=("parallel",),       # megacore sharding on v7x
            vmem_limit_bytes=vmem_limit),
    )(u_blocks, inner2d)

    # ---- light branch: spatial mean -> FC chain (tiny; XLA) ----------------
    feat = sums.reshape(N, num_blocks, 128)[:, :, :k].reshape(N, nc_input)
    feat = feat / float(HW)
    light = _prelu(feat @ w1.T, a_pred) @ w2.T                   # (N, nc_out)

    inner_out = inner2d_out.reshape(N, C, H, W)
    return (inner_out, inner_out[:, nc_input:],
            light.reshape(N, nc_output, 1, 1))


def lighting_net_forward(inner_feat, target_light, count, skip_count, params,
                         nc_input, nc_output, nc_middle,
                         channels_per_block=None):
    """Mirrors lightingNet.forward. count / skip_count are unused (as in PyTorch).
    NOTE: inner_feat is donated (updated in place); do not reuse it after the call."""
    del count, skip_count
    return _forward(inner_feat, target_light, params,
                    nc_input=nc_input, nc_output=nc_output, nc_middle=nc_middle,
                    channels_per_block=channels_per_block)


def lighting_net_reference(inner_feat, target_light, params,
                           nc_input, nc_output, nc_middle):
    """Pure-JAX reference of lightingNet.forward for validation."""
    w1 = params["predict_FC1"].reshape(nc_middle, nc_input)
    w2 = params["predict_FC2"].reshape(nc_output, nc_middle)
    p1 = params["post_FC1"].reshape(nc_middle, nc_output)
    p2 = params["post_FC2"].reshape(nc_input, nc_middle)
    a1 = params["predict_prelu"].reshape(())
    a2 = params["post_prelu"].reshape(())

    N, C, H, W = inner_feat.shape
    x = inner_feat[:, :nc_input, :, :]
    feat = x.mean(axis=(2, 3))                                 # (N, nc_in)
    light = _prelu(feat @ w1.T, a1) @ w2.T                     # (N, nc_out)
    tl = target_light.reshape(N, nc_output)
    up = jnp.maximum(_prelu(tl @ p1.T, a2) @ p2.T, 0.0)        # (N, nc_in)
    up = jnp.broadcast_to(up[:, :, None, None], (N, nc_input, H, W))
    inner_out = inner_feat.at[:, :nc_input, :, :].set(up)
    return inner_out, inner_out[:, nc_input:, :, :], light.reshape(N, nc_output, 1, 1)


if __name__ == "__main__":
    # Small, module-consistent shapes (HW = 256 lanes; C > ncInput so the
    # never-touched pass-through channels are non-empty).
    ncInput, ncOutput, ncMiddle = 8, 4, 16
    N, C, H, W = 2, 16, 16, 16

    key = jax.random.PRNGKey(0)
    k0, k1, k2, k3, k4, k5 = jax.random.split(key, 6)

    inner_feat = jax.random.normal(k0, (N, C, H, W), dtype=jnp.float32)
    target_light = jax.random.normal(k1, (N, ncOutput, 1, 1), dtype=jnp.float32)

    params = {
        "predict_FC1": 0.1 * jax.random.normal(k2, (ncMiddle, ncInput, 1, 1), jnp.float32),
        "predict_FC2": 0.1 * jax.random.normal(k3, (ncOutput, ncMiddle, 1, 1), jnp.float32),
        "post_FC1":    0.1 * jax.random.normal(k4, (ncMiddle, ncOutput, 1, 1), jnp.float32),
        "post_FC2":    0.1 * jax.random.normal(k5, (ncInput, ncMiddle, 1, 1), jnp.float32),
        "predict_prelu": jnp.array([0.25], jnp.float32),   # torch PReLU default init
        "post_prelu":    jnp.array([0.25], jnp.float32),
    }

    # Reference first (kernel calls donate their own copies of inner_feat).
    r_inner, r_rest, r_light = lighting_net_reference(
        inner_feat, target_light, params, ncInput, ncOutput, ncMiddle)

    # 1) auto packing: all 8 channels in one block, grid = 1 step.
    out1 = lighting_net_forward(jnp.copy(inner_feat), target_light, 0, 0, params,
                                ncInput, ncOutput, ncMiddle)
    # 2) forced k=2: 4 packed grid steps (exercises the packed index maps).
    out2 = lighting_net_forward(jnp.copy(inner_feat), target_light, 0, 0, params,
                                ncInput, ncOutput, ncMiddle, channels_per_block=2)
    jax.block_until_ready((out1, out2))

    for inner_out, rest, light in (out1, out2):
        assert jnp.allclose(inner_out, r_inner, atol=1e-5, rtol=1e-5)
        assert jnp.allclose(rest, r_rest, atol=1e-5, rtol=1e-5)
        assert jnp.allclose(light, r_light, atol=1e-5, rtol=1e-5)

    print("KERNEL_OK")
</pallas_src>

<mosaic_0001>
module attributes {stable_mosaic.version = 11 : i64} {
  func.func @lighting_kernel(%arg0: i32, %arg1: memref<1x2x8xf32, #tpu.memory_space<vmem>>, %arg2: memref<2x2048xf32, #tpu.memory_space<vmem>>, %arg3: memref<2x2048xf32, #tpu.memory_space<vmem>>, %arg4: memref<2x128xf32, #tpu.memory_space<vmem>>) attributes {dimension_semantics = [#tpu.dimension_semantics<parallel>], iteration_bounds = array<i64: 1>, scalar_prefetch = 0 : i64, scratch_operands = 0 : i64, tpu.core_type = #tpu.core_type<tc>, window_params = [{transform_indices = @transform_0, window_bounds = array<i64: 1, 2, 8>}, {transform_indices = @transform_1, window_bounds = array<i64: 2, 2048>}, {transform_indices = @transform_2, window_bounds = array<i64: 2, 2048>}, {transform_indices = @transform_3, window_bounds = array<i64: 2, 128>}]} {
    %c0 = arith.constant 0 : index
    %c0_0 = arith.constant 0 : index
    %0 = vector.load %arg2[%c0, %c0_0] : memref<2x2048xf32, #tpu.memory_space<vmem>>, vector<2x2048xf32>
    %c0_1 = arith.constant 0 : index
    %c0_2 = arith.constant 0 : index
    %c0_3 = arith.constant 0 : index
    %1 = vector.load %arg1[%c0_1, %c0_2, %c0_3] : memref<1x2x8xf32, #tpu.memory_space<vmem>>, vector<1x2x8xf32>
    %2 = vector.shape_cast %1 : vector<1x2x8xf32> to vector<2x8xf32>
    %3 = vector.extract_strided_slice %0 {offsets = [0, 0], sizes = [2, 256], strides = [1, 1]} : vector<2x2048xf32> to vector<2x256xf32>
    %cst = arith.constant dense<0.000000e+00> : vector<2xf32>
    %4 = vector.multi_reduction <add>, %3, %cst [1] : vector<2x256xf32> to vector<2xf32>
    %5 = vector.shape_cast %4 : vector<2xf32> to vector<2x1xf32>
    %6 = vector.extract_strided_slice %2 {offsets = [0, 0], sizes = [2, 1], strides = [1, 1]} : vector<2x8xf32> to vector<2x1xf32>
    %7 = vector.shape_cast %6 : vector<2x1xf32> to vector<2x1xf32>
    %8 = vector.broadcast %7 : vector<2x1xf32> to vector<2x256xf32>
    %9 = vector.extract_strided_slice %0 {offsets = [0, 256], sizes = [2, 256], strides = [1, 1]} : vector<2x2048xf32> to vector<2x256xf32>
    %cst_4 = arith.constant dense<0.000000e+00> : vector<2xf32>
    %10 = vector.multi_reduction <add>, %9, %cst_4 [1] : vector<2x256xf32> to vector<2xf32>
    %11 = vector.shape_cast %10 : vector<2xf32> to vector<2x1xf32>
    %12 = vector.extract_strided_slice %2 {offsets = [0, 1], sizes = [2, 1], strides = [1, 1]} : vector<2x8xf32> to vector<2x1xf32>
    %13 = vector.shape_cast %12 : vector<2x1xf32> to vector<2x1xf32>
    %14 = vector.broadcast %13 : vector<2x1xf32> to vector<2x256xf32>
    %15 = vector.extract_strided_slice %0 {offsets = [0, 512], sizes = [2, 256], strides = [1, 1]} : vector<2x2048xf32> to vector<2x256xf32>
    %cst_5 = arith.constant dense<0.000000e+00> : vector<2xf32>
    %16 = vector.multi_reduction <add>, %15, %cst_5 [1] : vector<2x256xf32> to vector<2xf32>
    %17 = vector.shape_cast %16 : vector<2xf32> to vector<2x1xf32>
    %18 = vector.extract_strided_slice %2 {offsets = [0, 2], sizes = [2, 1], strides = [1, 1]} : vector<2x8xf32> to vector<2x1xf32>
    %19 = vector.shape_cast %18 : vector<2x1xf32> to vector<2x1xf32>
    %20 = vector.broadcast %19 : vector<2x1xf32> to vector<2x256xf32>
    %21 = vector.extract_strided_slice %0 {offsets = [0, 768], sizes = [2, 256], strides = [1, 1]} : vector<2x2048xf32> to vector<2x256xf32>
    %cst_6 = arith.constant dense<0.000000e+00> : vector<2xf32>
    %22 = vector.multi_reduction <add>, %21, %cst_6 [1] : vector<2x256xf32> to vector<2xf32>
    %23 = vector.shape_cast %22 : vector<2xf32> to vector<2x1xf32>
    %24 = vector.extract_strided_slice %2 {offsets = [0, 3], sizes = [2, 1], strides = [1, 1]} : vector<2x8xf32> to vector<2x1xf32>
    %25 = vector.shape_cast %24 : vector<2x1xf32> to vector<2x1xf32>
    %26 = vector.broadcast %25 : vector<2x1xf32> to vector<2x256xf32>
    %27 = vector.extract_strided_slice %0 {offsets = [0, 1024], sizes = [2, 256], strides = [1, 1]} : vector<2x2048xf32> to vector<2x256xf32>
    %cst_7 = arith.constant dense<0.000000e+00> : vector<2xf32>
    %28 = vector.multi_reduction <add>, %27, %cst_7 [1] : vector<2x256xf32> to vector<2xf32>
    %29 = vector.shape_cast %28 : vector<2xf32> to vector<2x1xf32>
    %30 = vector.extract_strided_slice %2 {offsets = [0, 4], sizes = [2, 1], strides = [1, 1]} : vector<2x8xf32> to vector<2x1xf32>
    %31 = vector.shape_cast %30 : vector<2x1xf32> to vector<2x1xf32>
    %32 = vector.broadcast %31 : vector<2x1xf32> to vector<2x256xf32>
    %33 = vector.extract_strided_slice %0 {offsets = [0, 1280], sizes = [2, 256], strides = [1, 1]} : vector<2x2048xf32> to vector<2x256xf32>
    %cst_8 = arith.constant dense<0.000000e+00> : vector<2xf32>
    %34 = vector.multi_reduction <add>, %33, %cst_8 [1] : vector<2x256xf32> to vector<2xf32>
    %35 = vector.shape_cast %34 : vector<2xf32> to vector<2x1xf32>
    %36 = vector.extract_strided_slice %2 {offsets = [0, 5], sizes = [2, 1], strides = [1, 1]} : vector<2x8xf32> to vector<2x1xf32>
    %37 = vector.shape_cast %36 : vector<2x1xf32> to vector<2x1xf32>
    %38 = vector.broadcast %37 : vector<2x1xf32> to vector<2x256xf32>
    %39 = vector.extract_strided_slice %0 {offsets = [0, 1536], sizes = [2, 256], strides = [1, 1]} : vector<2x2048xf32> to vector<2x256xf32>
    %cst_9 = arith.constant dense<0.000000e+00> : vector<2xf32>
    %40 = vector.multi_reduction <add>, %39, %cst_9 [1] : vector<2x256xf32> to vector<2xf32>
    %41 = vector.shape_cast %40 : vector<2xf32> to vector<2x1xf32>
    %42 = vector.extract_strided_slice %2 {offsets = [0, 6], sizes = [2, 1], strides = [1, 1]} : vector<2x8xf32> to vector<2x1xf32>
    %43 = vector.shape_cast %42 : vector<2x1xf32> to vector<2x1xf32>
    %44 = vector.broadcast %43 : vector<2x1xf32> to vector<2x256xf32>
    %45 = vector.extract_strided_slice %0 {offsets = [0, 1792], sizes = [2, 256], strides = [1, 1]} : vector<2x2048xf32> to vector<2x256xf32>
    %cst_10 = arith.constant dense<0.000000e+00> : vector<2xf32>
    %46 = vector.multi_reduction <add>, %45, %cst_10 [1] : vector<2x256xf32> to vector<2xf32>
    %47 = vector.shape_cast %46 : vector<2xf32> to vector<2x1xf32>
    %48 = vector.extract_strided_slice %2 {offsets = [0, 7], sizes = [2, 1], strides = [1, 1]} : vector<2x8xf32> to vector<2x1xf32>
    %49 = vector.shape_cast %48 : vector<2x1xf32> to vector<2x1xf32>
    %50 = vector.broadcast %49 : vector<2x1xf32> to vector<2x256xf32>
    %cst_11 = arith.constant 0.000000e+00 : f32
    %51 = vector.broadcast %cst_11 : f32 to vector<2x120xf32>
    %52 = tpu.concatenate %5, %11, %17, %23, %29, %35, %41, %47, %51 in 1 : vector<2x1xf32>, vector<2x1xf32>, vector<2x1xf32>, vector<2x1xf32>, vector<2x1xf32>, vector<2x1xf32>, vector<2x1xf32>, vector<2x1xf32>, vector<2x120xf32> -> vector<2x128xf32>
    %c0_12 = arith.constant 0 : index
    %c0_13 = arith.constant 0 : index
    %53 = vector.load %arg4[%c0_12, %c0_13] : memref<2x128xf32, #tpu.memory_space<vmem>>, vector<2x128xf32>
    tpu.vector_store %arg4[%c0_12, %c0_13], %52 {strides = array<i32>} : memref<2x128xf32, #tpu.memory_space<vmem>>, vector<2x128xf32>,
    %54 = tpu.concatenate %8, %14, %20, %26, %32, %38, %44, %50 in 1 : vector<2x256xf32>, vector<2x256xf32>, vector<2x256xf32>, vector<2x256xf32>, vector<2x256xf32>, vector<2x256xf32>, vector<2x256xf32>, vector<2x256xf32> -> vector<2x2048xf32>
    %c0_14 = arith.constant 0 : index
    %c0_15 = arith.constant 0 : index
    %55 = vector.load %arg3[%c0_14, %c0_15] : memref<2x2048xf32, #tpu.memory_space<vmem>>, vector<2x2048xf32>
    tpu.vector_store %arg3[%c0_14, %c0_15], %54 {strides = array<i32>} : memref<2x2048xf32, #tpu.memory_space<vmem>>, vector<2x2048xf32>,
    return
  }
  func.func @transform_0(%arg0: i32) -> (i32, i32, i32) {
    %c0_i32 = arith.constant 0 : i32
    %c0_i32_0 = arith.constant 0 : i32
    %c0_i32_1 = arith.constant 0 : i32
    return %arg0, %c0_i32, %c0_i32_0 : i32, i32, i32
  }
  func.func @transform_1(%arg0: i32) -> (i32, i32) {
    %c0_i32 = arith.constant 0 : i32
    %c0_i32_0 = arith.constant 0 : i32
    return %c0_i32, %arg0 : i32, i32
  }
  func.func @transform_2(%arg0: i32) -> (i32, i32) {
    %c0_i32 = arith.constant 0 : i32
    %c0_i32_0 = arith.constant 0 : i32
    return %c0_i32, %arg0 : i32, i32
  }
  func.func @transform_3(%arg0: i32) -> (i32, i32) {
    %c0_i32 = arith.constant 0 : i32
    %c0_i32_0 = arith.constant 0 : i32
    return %c0_i32, %arg0 : i32, i32
  }
}

</mosaic_0001>

<llo_original>
// kernel: _forward.1
$region0: #{_forward.1}
  #allocation0 [shape = 'u32[]', space=smem, size = 0x4, offset = 0x4, fixed_abs, tag = 'smem constant byte address 0x4 - core index']
  #allocation1 [shape = 'u32[144,128]{1,0:T(1,128)}', space=vmem, size = 0x12000, scoped, tag = 'internal scratch']
  %s0 = inlined_call_operand.vmem [shape: f32[1,2,8], index: 0, kind: input, shape index: {}]
  %s1 = inlined_call_operand.vmem [shape: f32[2,4096], index: 1, kind: input, shape index: {}, may-alias: {1,2}]
  %s2 = inlined_call_operand.vmem [shape: f32[2,4096], index: 2, kind: output, shape index: {0}, may-alias: {1,2}]
  %s3 = inlined_call_operand.vmem [shape: f32[2,128], index: 3, kind: output, shape index: {1}]
  %4 = xla_tuple %s2, %s3
  %s5 = sld [smem:[#allocation0]]
  $region26: #{_forward.1} parent=0
    _
  %s7 = ssub.s32 1, %s5
  %s8 = scalar_select 0, %s7, %s5
  // Predicated region
  $region2: #{_forward.1} parent=0 // pred_check
    _
  $region3: #{_forward.1} parent=0 // pred_check_branch
    %10 = sbr.rel (0) target = $region5
  $region4: #{_forward.1} parent=0 // pred_region
    _
  $region5: #{_forward.1} parent=0 // pred_fallthru
    _
  // Predicated region
  $region6: #{_forward.1} parent=0 // pred_check
    _
  $region7: #{_forward.1} parent=0 // pred_check_branch
    %12 = sbr.rel (0) target = $region9
  $region8: #{_forward.1} parent=0 // pred_region
    _
  $region9: #{_forward.1} parent=0 // pred_fallthru
    _
  %v13 = vld [vmem:[%s1] sm:$0xff]
  %v14 = vld [vmem:[%s1 + $0x8] sm:$0xff]
  %v15 = vld [vmem:[%s1 + $0x10] sm:$0xff]
  %v16 = vld [vmem:[%s1 + $0x18] sm:$0xff]
  %v17 = vld [vmem:[%s0] sm:$0x3]
  %v20 = vunpack.c.l.s4 1983009808
  %v21 = vunpack.c.0.s8 %v20
  %v22 = vlaneseq
  %v23 = vshrl.u32 %v22, 7
  %v24 = vsub.s32 %v21, %v23
  %v25 = vrot.slane %v13, %v24
  %v26 = vcombine.high %v25, %v25
  %vm29 = vcmask 1041408
  %v30 = vsel %vm29, %v25, 0.0
  %v31 = vsel %vm29, %v26, 0.0
  %v32 = vadd.f32 %v30, %v31
  %33 = vadd.xlane.f32.xlu0 %v32
  %v34 = vpop.xlane.xlu0 %33
  %36 = vset.pattern.permute.xlu0 0
  %37 = vperm.xlu0 %36, %v17
  %v38 = vpop.permute.xlu0 %37
  %v39 = vcombine.high %v13, %v13
  %v41 = vunpack.c.l.s4 1983009808
  %v42 = vunpack.c.0.s8 %v41
  %v43 = vlaneseq
  %v44 = vshrl.u32 %v43, 7
  %v45 = vsub.s32 %v42, %v44
  %v46 = vrot.slane %v39, %v45
  %v47 = vcombine.high %v46, %v46
  %v50 = vsel %vm29, %v46, 0.0
  %v51 = vsel %vm29, %v47, 0.0
  %v52 = vadd.f32 %v50, %v51
  %53 = vadd.xlane.f32.xlu0 %v52
  %v54 = vpop.xlane.xlu0 %53
  %55 = vset.pattern.permute.xlu0 1
  %56 = vperm.xlu0 %55, %v17
  %v57 = vpop.permute.xlu0 %56
  %v60 = vunpack.c.l.s4 1983009808
  %v61 = vunpack.c.0.s8 %v60
  %v62 = vlaneseq
  %v63 = vshrl.u32 %v62, 7
  %v64 = vsub.s32 %v61, %v63
  %v65 = vrot.slane %v14, %v64
  %v66 = vcombine.high %v65, %v65
  %v69 = vsel %vm29, %v65, 0.0
  %v70 = vsel %vm29, %v66, 0.0
  %v71 = vadd.f32 %v69, %v70
  %72 = vadd.xlane.f32.xlu0 %v71
  %v73 = vpop.xlane.xlu0 %72
  %74 = vset.pattern.permute.xlu0 2
  %75 = vperm.xlu0 %74, %v17
  %v76 = vpop.permute.xlu0 %75
  %v77 = vcombine.high %v14, %v14
  %v79 = vunpack.c.l.s4 1983009808
  %v80 = vunpack.c.0.s8 %v79
  %v81 = vlaneseq
  %v82 = vshrl.u32 %v81, 7
  %v83 = vsub.s32 %v80, %v82
  %v84 = vrot.slane %v77, %v83
  %v85 = vcombine.high %v84, %v84
  %v88 = vsel %vm29, %v84, 0.0
  %v89 = vsel %vm29, %v85, 0.0
  %v90 = vadd.f32 %v88, %v89
  %91 = vadd.xlane.f32.xlu0 %v90
  %v92 = vpop.xlane.xlu0 %91
  %93 = vset.pattern.permute.xlu0 3
  %94 = vperm.xlu0 %93, %v17
  %v95 = vpop.permute.xlu0 %94
  %v98 = vunpack.c.l.s4 1983009808
  %v99 = vunpack.c.0.s8 %v98
  %v100 = vlaneseq
  %v101 = vshrl.u32 %v100, 7
  %v102 = vsub.s32 %v99, %v101
  %v103 = vrot.slane %v15, %v102
  %v104 = vcombine.high %v103, %v103
  %v107 = vsel %vm29, %v103, 0.0
  %v108 = vsel %vm29, %v104, 0.0
  %v109 = vadd.f32 %v107, %v108
  %110 = vadd.xlane.f32.xlu0 %v109
  %v111 = vpop.xlane.xlu0 %110
  %112 = vset.pattern.permute.xlu0 4
  %113 = vperm.xlu0 %112, %v17
  %v114 = vpop.permute.xlu0 %113
  %v115 = vcombine.high %v15, %v15
  %v117 = vunpack.c.l.s4 1983009808
  %v118 = vunpack.c.0.s8 %v117
  %v119 = vlaneseq
  %v120 = vshrl.u32 %v119, 7
  %v121 = vsub.s32 %v118, %v120
  %v122 = vrot.slane %v115, %v121
  %v123 = vcombine.high %v122, %v122
  %v126 = vsel %vm29, %v122, 0.0
  %v127 = vsel %vm29, %v123, 0.0
  %v128 = vadd.f32 %v126, %v127
  %129 = vadd.xlane.f32.xlu0 %v128
  %v130 = vpop.xlane.xlu0 %129
  %131 = vset.pattern.permute.xlu0 5
  %132 = vperm.xlu0 %131, %v17
  %v133 = vpop.permute.xlu0 %132
  %v136 = vunpack.c.l.s4 1983009808
  %v137 = vunpack.c.0.s8 %v136
  %v138 = vlaneseq
  %v139 = vshrl.u32 %v138, 7
  %v140 = vsub.s32 %v137, %v139
  %v141 = vrot.slane %v16, %v140
  %v142 = vcombine.high %v141, %v141
  %v145 = vsel %vm29, %v141, 0.0
  %v146 = vsel %vm29, %v142, 0.0
  %v147 = vadd.f32 %v145, %v146
  %148 = vadd.xlane.f32.xlu0 %v147
  %v149 = vpop.xlane.xlu0 %148
  %150 = vset.pattern.permute.xlu0 6
  %151 = vperm.xlu0 %150, %v17
  %v152 = vpop.permute.xlu0 %151
  %v153 = vcombine.high %v16, %v16
  %v155 = vunpack.c.l.s4 1983009808
  %v156 = vunpack.c.0.s8 %v155
  %v157 = vlaneseq
  %v158 = vshrl.u32 %v157, 7
  %v159 = vsub.s32 %v156, %v158
  %v160 = vrot.slane %v153, %v159
  %v161 = vcombine.high %v160, %v160
  %v164 = vsel %vm29, %v160, 0.0
  %v165 = vsel %vm29, %v161, 0.0
  %v166 = vadd.f32 %v164, %v165
  %167 = vadd.xlane.f32.xlu0 %v166
  %v168 = vpop.xlane.xlu0 %167
  %169 = vset.pattern.permute.xlu0 7
  %170 = vperm.xlu0 %169, %v17
  %v171 = vpop.permute.xlu0 %170
  %vm172 = vcmask 7168
  %v173 = vsel %vm172, %v34, %v54
  %vm174 = vcmask 15360
  %v175 = vsel %vm174, %v173, %v73
  %vm176 = vcmask 23552
  %v177 = vsel %vm176, %v175, %v92
  %vm178 = vcmask 31744
  %v179 = vsel %vm178, %v177, %v111
  %vm180 = vcmask 39936
  %v181 = vsel %vm180, %v179, %v130
  %vm182 = vcmask 48128
  %v183 = vsel %vm182, %v181, %v149
  %vm184 = vcmask 56320
  %v185 = vsel %vm184, %v183, %v168
  %vm186 = vcmask 64512
  %v187 = vsel %vm186, %v185, 0.0
  %188 = vst [vmem:[%s3] sm:$0x3] %v187
  %v189 = vcombine.low %v38, %v38
  %v190 = vcombine.low %v57, %v57
  %v192 = vunpack.c.l.s4 1983009808
  %v193 = vunpack.c.0.s8 %v192
  %v194 = vlaneseq
  %v195 = vshrl.u32 %v194, 7
  %v196 = vsub.s32 %v193, %v195
  %v197 = vrot.slane %v189, %v196
  %v199 = vunpack.c.l.s4 1983009808
  %v200 = vunpack.c.0.s8 %v199
  %v201 = vlaneseq
  %v202 = vshrl.u32 %v201, 7
  %v203 = vsub.s32 %v200, %v202
  %v204 = vrot.slane %v190, %v203
  %v205 = vcombine.low %v197, %v204
  %v206 = vcombine.low %v76, %v76
  %v207 = vcombine.low %v95, %v95
  %v209 = vunpack.c.l.s4 1983009808
  %v210 = vunpack.c.0.s8 %v209
  %v211 = vlaneseq
  %v212 = vshrl.u32 %v211, 7
  %v213 = vsub.s32 %v210, %v212
  %v214 = vrot.slane %v206, %v213
  %v216 = vunpack.c.l.s4 1983009808
  %v217 = vunpack.c.0.s8 %v216
  %v218 = vlaneseq
  %v219 = vshrl.u32 %v218, 7
  %v220 = vsub.s32 %v217, %v219
  %v221 = vrot.slane %v207, %v220
  %v222 = vcombine.low %v214, %v221
  %v223 = vcombine.low %v114, %v114
  %v224 = vcombine.low %v133, %v133
  %v226 = vunpack.c.l.s4 1983009808
  %v227 = vunpack.c.0.s8 %v226
  %v228 = vlaneseq
  %v229 = vshrl.u32 %v228, 7
  %v230 = vsub.s32 %v227, %v229
  %v231 = vrot.slane %v223, %v230
  %v233 = vunpack.c.l.s4 1983009808
  %v234 = vunpack.c.0.s8 %v233
  %v235 = vlaneseq
  %v236 = vshrl.u32 %v235, 7
  %v237 = vsub.s32 %v234, %v236
  %v238 = vrot.slane %v224, %v237
  %v239 = vcombine.low %v231, %v238
  %v240 = vcombine.low %v152, %v152
  %v241 = vcombine.low %v171, %v171
  %v243 = vunpack.c.l.s4 1983009808
  %v244 = vunpack.c.0.s8 %v243
  %v245 = vlaneseq
  %v246 = vshrl.u32 %v245, 7
  %v247 = vsub.s32 %v244, %v246
  %v248 = vrot.slane %v240, %v247
  %v250 = vunpack.c.l.s4 1983009808
  %v251 = vunpack.c.0.s8 %v250
  %v252 = vlaneseq
  %v253 = vshrl.u32 %v252, 7
  %v254 = vsub.s32 %v251, %v253
  %v255 = vrot.slane %v241, %v254
  %v256 = vcombine.low %v248, %v255
  %261 = vst [vmem:[%s2] sm:$0xff] %v205
  %262 = vst [vmem:[%s2 + $0x8] sm:$0xff] %v222
  %263 = vst [vmem:[%s2 + $0x10] sm:$0xff] %v239
  %264 = vst [vmem:[%s2 + $0x18] sm:$0xff] %v256
  // Predicated region
  $region10: #{_forward.1} parent=0 // pred_check
    _
  $region11: #{_forward.1} parent=0 // pred_check_branch
    %266 = sbr.rel (0) target = $region13
  $region12: #{_forward.1} parent=0 // pred_region
    _
  $region13: #{_forward.1} parent=0 // pred_fallthru
    _
  // Predicated region
  $region14: #{_forward.1} parent=0 // pred_check
    _
  $region15: #{_forward.1} parent=0 // pred_check_branch
    %268 = sbr.rel (0) target = $region17
  $region16: #{_forward.1} parent=0 // pred_region
    _
  $region17: #{_forward.1} parent=0 // pred_fallthru
    _
  // Predicated region
  $region18: #{_forward.1} parent=0 // pred_check
    _
  $region19: #{_forward.1} parent=0 // pred_check_branch
    %270 = sbr.rel (0) target = $region21
  $region20: #{_forward.1} parent=0 // pred_region
    _
  $region21: #{_forward.1} parent=0 // pred_fallthru
    _
  // Predicated region
  $region22: #{_forward.1} parent=0 // pred_check
    _
  $region23: #{_forward.1} parent=0 // pred_check_branch
    %272 = sbr.rel (0) target = $region25
  $region24: #{_forward.1} parent=0 // pred_region
    _
  $region25: #{_forward.1} parent=0 // pred_fallthru
    _

</llo_original>
